<compile_context>
chip_gen: v6e
topology: v6e:2x2x1
jax: 0.10.0
libtpu: 0.0.40
codegen_flags: <defaults>
</compile_context>

<pallas_src>
import functools
import math

import jax
import jax.numpy as jnp
from jax.experimental import pallas as pl
from jax.experimental.pallas import tpu as pltpu


def _cdiv(a, b):
    return -(-a // b)


# ---------------------------------------------------------------------------
# Elementwise Izhikevich Euler step (branch-free, folded constants).
# ---------------------------------------------------------------------------
def _step(v, u, I, *, Vmin, d, Vr, Vt, Vpeak, hk_over_C, h_over_C,
          one_minus_ha, hab, spk_dtype):
    if I.dtype != v.dtype:
        I = I.astype(v.dtype)                     # bf16 current -> f32 compute
    fired = v >= Vpeak
    # v' = v + (h/C)*(k*(v-Vr)*(v-Vt) - u + I), with k folded into h*k/C.
    v_sub = v + hk_over_C * (v - Vr) * (v - Vt) + h_over_C * (I - u)
    # u' = u + h*a*(b*(v'-Vr) - u)  ==  (1 - h*a)*u + h*a*b*(v'-Vr)
    u_sub = one_minus_ha * u + hab * (v_sub - Vr)
    v_new = jnp.where(fired, Vmin, v_sub)
    u_new = jnp.where(fired, u + d, u_sub)
    return fired.astype(spk_dtype), v_new, u_new


def _fold_consts(k, a, b, Vmin, d, C, Vr, Vt, Vpeak, h):
    return dict(Vmin=Vmin, d=d, Vr=Vr, Vt=Vt, Vpeak=Vpeak,
                hk_over_C=h * k / C, h_over_C=h / C,
                one_minus_ha=1.0 - h * a, hab=h * a * b)


# ---------------------------------------------------------------------------
# Kernels
# ---------------------------------------------------------------------------
def _izhikevich_kernel(v_ref, u_ref, i_ref, spk_ref, v_out_ref, u_out_ref,
                       *, consts):
    spk, v_new, u_new = _step(v_ref[...], u_ref[...], i_ref[...],
                              spk_dtype=spk_ref.dtype, **consts)
    spk_ref[...] = spk
    v_out_ref[...] = v_new
    u_out_ref[...] = u_new


def _izhikevich_multistep_kernel(v_ref, u_ref, i_ref,
                                 spk_ref, v_out_ref, u_out_ref, *, consts):
    # grid = (row_blocks, T); t is the inner "arbitrary" axis.  The v/u output
    # BlockSpecs return the same block index for every t, so v_out/u_out are
    # the VMEM-resident carry: initialize from v_ref/u_ref at t == 0, update
    # every t, Pallas writes them back to HBM once per row block after the
    # last t.  No extra scratch buffers needed.
    t = pl.program_id(1)

    @pl.when(t == 0)
    def _():
        v_out_ref[...] = v_ref[...]
        u_out_ref[...] = u_ref[...]

    spk, v_new, u_new = _step(v_out_ref[...], u_out_ref[...], i_ref[0],
                              spk_dtype=spk_ref.dtype, **consts)
    spk_ref[0] = spk
    v_out_ref[...] = v_new
    u_out_ref[...] = u_new


# ---------------------------------------------------------------------------
# Wrapper-side slab planning (lane-dense layout, large tiles, minimal padding).
# ---------------------------------------------------------------------------
_ROW_ALIGN = 32      # multiple of 32 keeps int8 spike blocks (32,128)-tileable


def _plan_slab(total, lane_width, block_rows, min_row_blocks=2):
    assert lane_width % 128 == 0 and block_rows % _ROW_ALIGN == 0
    L = lane_width
    while L > 128 and total < _ROW_ALIGN * L:    # shrink lanes, tiny problems
        L //= 2
    rows = _cdiv(total, L)
    block_r = max(_ROW_ALIGN,
                  (min(block_rows, rows) // _ROW_ALIGN) * _ROW_ALIGN)
    # v7x shards the "parallel" row axis over 2 TensorCores: prefer >= 2 row
    # blocks so neither core idles (this overrides "bigger blocks").
    while _cdiv(rows, block_r) < min_row_blocks and block_r > _ROW_ALIGN:
        block_r = max(_ROW_ALIGN, ((block_r // 2) // _ROW_ALIGN) * _ROW_ALIGN)
    padded_rows = _cdiv(rows, block_r) * block_r
    return L, block_r, padded_rows


def _to_slab(x, padded_rows, L, dtype=jnp.float32):
    # Fast path: pure reshape (no HBM copy) when no padding is required.
    flat = x.reshape(-1)
    if flat.dtype != dtype:
        flat = flat.astype(dtype)
    pad = padded_rows * L - flat.shape[0]
    if pad:
        flat = jnp.pad(flat, (0, pad))
    return flat.reshape(padded_rows, L)


def _from_slab(x, total, shape):
    if x.size == total:
        return x.reshape(shape)
    return x.reshape(-1)[:total].reshape(shape)


# ---------------------------------------------------------------------------
# Public entry points
# ---------------------------------------------------------------------------
def izhikevich_forward(v, u, I, *,
                       k=0.4471817006977834,
                       a=0.0032799410036917333,
                       b=24.478421990208606,
                       Vmin=-66.46563513097735,
                       d=50.0,
                       C=38.0,
                       Vr=-77.40291336465064,
                       Vt=-44.90054428048817,
                       Vpeak=15.489726771001997,
                       h=0.1,
                       lane_width=1024,
                       block_rows=256,                    # v6e can raise to 1024
                       vmem_limit_bytes=48 * 1024 * 1024,  # safe on v7x (64 MiB)
                       spk_dtype=jnp.int8,                # {0,1} spikes
                       i_dtype=jnp.float32):              # bf16 halves I stream
    """One vectorized Izhikevich Euler step. v, u, I: same-shape float arrays.

    Returns (spk, v_new, u_new) with the input shape. spk is int8 by default
    (set spk_dtype=jnp.float32 if a float spike train is required).
    """
    assert v.shape == u.shape == I.shape
    shape = v.shape
    total = math.prod(shape)

    L, block_r, padded_rows = _plan_slab(total, lane_width, block_rows)
    v2 = _to_slab(v, padded_rows, L)
    u2 = _to_slab(u, padded_rows, L)
    I2 = _to_slab(I, padded_rows, L, dtype=i_dtype)

    kernel = functools.partial(
        _izhikevich_kernel,
        consts=_fold_consts(k, a, b, Vmin, d, C, Vr, Vt, Vpeak, h))

    spec = pl.BlockSpec((block_r, L), lambda i: (i, 0))
    f32 = jax.ShapeDtypeStruct((padded_rows, L), jnp.float32)

    spk, v_new, u_new = pl.pallas_call(
        kernel,
        grid=(padded_rows // block_r,),
        in_specs=[spec, spec, spec],
        out_specs=(spec, spec, spec),
        out_shape=(jax.ShapeDtypeStruct((padded_rows, L), spk_dtype), f32, f32),
        input_output_aliases={0: 1, 1: 2},   # v -> v_new, u -> u_new
        compiler_params=pltpu.CompilerParams(
            dimension_semantics=("parallel",),
            vmem_limit_bytes=vmem_limit_bytes),
    )(v2, u2, I2)

    return (_from_slab(spk, total, shape),
            _from_slab(v_new, total, shape),
            _from_slab(u_new, total, shape))


def izhikevich_multistep(v, u, I_seq, *,
                         k=0.4471817006977834,
                         a=0.0032799410036917333,
                         b=24.478421990208606,
                         Vmin=-66.46563513097735,
                         d=50.0,
                         C=38.0,
                         Vr=-77.40291336465064,
                         Vt=-44.90054428048817,
                         Vpeak=15.489726771001997,
                         h=0.1,
                         lane_width=1024,
                         block_rows=512,                    # scratch-free: 2 MiB blocks
                         vmem_limit_bytes=48 * 1024 * 1024,  # safe on v7x (64 MiB)
                         spk_dtype=jnp.int8,                # {0,1} spikes
                         i_dtype=jnp.float32,               # bf16 halves I stream
                         i_buffers=3):                      # triple-buffer I(t)
    """T fused Izhikevich Euler steps. I_seq: shape (T,) + v.shape.

    v/u stay resident in VMEM (in the output blocks) across the T steps; only
    I(t) and spk(t) stream through HBM per step.
    Returns (spk_seq [T, ...], v_T, u_T).
    """
    T = I_seq.shape[0]
    assert I_seq.shape[1:] == v.shape == u.shape
    shape = v.shape
    total = math.prod(shape)

    L, block_r, padded_rows = _plan_slab(total, lane_width, block_rows)
    v2 = _to_slab(v, padded_rows, L)
    u2 = _to_slab(u, padded_rows, L)

    pad = padded_rows * L - total
    I_flat = I_seq.reshape(T, -1)
    if I_flat.dtype != i_dtype:
        I_flat = I_flat.astype(i_dtype)
    if pad:
        # Only materialize a padded copy when the flattened size is ragged;
        # the common case (size divisible by L and row alignment) is a free
        # reshape with no extra HBM traffic.
        I_flat = jnp.pad(I_flat, ((0, 0), (0, pad)))
    I2 = I_flat.reshape(T, padded_rows, L)

    kernel = functools.partial(
        _izhikevich_multistep_kernel,
        consts=_fold_consts(k, a, b, Vmin, d, C, Vr, Vt, Vpeak, h))

    state_spec = pl.BlockSpec((block_r, L), lambda i, t: (i, 0))
    if i_buffers is not None and i_buffers > 2:
        i_spec = pl.BlockSpec((1, block_r, L), lambda i, t: (t, i, 0),
                              pipeline_mode=pl.Buffered(i_buffers))
    else:
        i_spec = pl.BlockSpec((1, block_r, L), lambda i, t: (t, i, 0))
    spk_spec = pl.BlockSpec((1, block_r, L), lambda i, t: (t, i, 0))
    f32 = jax.ShapeDtypeStruct((padded_rows, L), jnp.float32)

    spk, v_new, u_new = pl.pallas_call(
        kernel,
        grid=(padded_rows // block_r, T),
        in_specs=[state_spec, state_spec, i_spec],
        out_specs=(spk_spec, state_spec, state_spec),
        out_shape=(jax.ShapeDtypeStruct((T, padded_rows, L), spk_dtype), f32, f32),
        input_output_aliases={0: 1, 1: 2},   # v -> v_T, u -> u_T
        compiler_params=pltpu.CompilerParams(
            dimension_semantics=("parallel", "arbitrary"),
            vmem_limit_bytes=vmem_limit_bytes),
    )(v2, u2, I2)

    if padded_rows * L == total:
        spk_seq = spk.reshape((T,) + shape)
    else:
        spk_seq = spk.reshape(T, padded_rows * L)[:, :total].reshape((T,) + shape)
    return (spk_seq,
            _from_slab(v_new, total, shape),
            _from_slab(u_new, total, shape))


if __name__ == "__main__":
    key = jax.random.PRNGKey(0)
    k1, k2, k3, k4 = jax.random.split(key, 4)

    N, D = 64, 128  # small neuron population, lane-dense last dim

    k_, a_, b_ = 0.4471817006977834, 0.0032799410036917333, 24.478421990208606
    Vmin_, d_, C_ = -66.46563513097735, 50.0, 38.0
    Vr_, Vt_, Vpeak_ = -77.40291336465064, -44.90054428048817, 15.489726771001997
    h_ = 0.1

    # Membrane potentials spanning below and above Vpeak so both branches fire.
    v0 = Vr_ + jax.random.uniform(k1, (N, D), jnp.float32, 0.0, 120.0)
    u0 = jax.random.uniform(k2, (N, D), jnp.float32, -5.0, 5.0)
    I0 = jax.random.uniform(k3, (N, D), jnp.float32, 0.0, 100.0)

    # Plain-JAX reference in the original PyTorch op order.
    def ref_step(v, u, I):
        fired = v >= Vpeak_
        v_sub = v + h_ * (k_ * (v - Vr_) * (v - Vt_) - u + I) / C_
        u_sub = u + h_ * (a_ * (b_ * (v_sub - Vr_) - u))
        return (jnp.where(fired, 1.0, 0.0),
                jnp.where(fired, Vmin_, v_sub),
                jnp.where(fired, u + d_, u_sub))

    # --- single Euler step ---
    spk, v1, u1 = izhikevich_forward(v0, u0, I0, h=h_)
    jax.block_until_ready((spk, v1, u1))

    spk_r, v_r, u_r = ref_step(v0, u0, I0)
    assert jnp.array_equal(spk.astype(jnp.float32), spk_r)
    assert jnp.allclose(v1, v_r, rtol=1e-5, atol=1e-4)
    assert jnp.allclose(u1, u_r, rtol=1e-5, atol=1e-4)

    # --- fused multi-step kernel vs. iterating the (validated) single step ---
    T = 4
    I_seq = jax.random.uniform(k4, (T, N, D), jnp.float32, 0.0, 100.0)
    spk_seq, vT, uT = izhikevich_multistep(v0, u0, I_seq, h=h_)
    jax.block_until_ready((spk_seq, vT, uT))

    v_it, u_it = v0, u0
    spk_it = []
    for t in range(T):
        s_t, v_it, u_it = izhikevich_forward(v_it, u_it, I_seq[t], h=h_)
        spk_it.append(s_t)
    spk_it = jnp.stack(spk_it)

    assert jnp.array_equal(spk_seq, spk_it)
    assert jnp.allclose(vT, v_it, rtol=1e-5, atol=1e-5)
    assert jnp.allclose(uT, u_it, rtol=1e-5, atol=1e-5)

    print("KERNEL_OK")
</pallas_src>

<mosaic_0001>
module attributes {stable_mosaic.version = 11 : i64} {
  func.func @_izhikevich_kernel(%arg0: i32, %arg1: memref<32x256xf32, #tpu.memory_space<vmem>>, %arg2: memref<32x256xf32, #tpu.memory_space<vmem>>, %arg3: memref<32x256xf32, #tpu.memory_space<vmem>>, %arg4: memref<32x256xi8, #tpu.memory_space<vmem>>, %arg5: memref<32x256xf32, #tpu.memory_space<vmem>>, %arg6: memref<32x256xf32, #tpu.memory_space<vmem>>) attributes {dimension_semantics = [#tpu.dimension_semantics<parallel>], iteration_bounds = array<i64: 1>, scalar_prefetch = 0 : i64, scratch_operands = 0 : i64, tpu.core_type = #tpu.core_type<tc>, window_params = [{transform_indices = @transform_0, window_bounds = array<i64: 32, 256>}, {transform_indices = @transform_1, window_bounds = array<i64: 32, 256>}, {transform_indices = @transform_2, window_bounds = array<i64: 32, 256>}, {transform_indices = @transform_3, window_bounds = array<i64: 32, 256>}, {transform_indices = @transform_4, window_bounds = array<i64: 32, 256>}, {transform_indices = @transform_5, window_bounds = array<i64: 32, 256>}]} {
    %c0 = arith.constant 0 : index
    %c0_0 = arith.constant 0 : index
    %0 = vector.load %arg1[%c0, %c0_0] : memref<32x256xf32, #tpu.memory_space<vmem>>, vector<32x256xf32>
    %c0_1 = arith.constant 0 : index
    %c0_2 = arith.constant 0 : index
    %1 = vector.load %arg2[%c0_1, %c0_2] : memref<32x256xf32, #tpu.memory_space<vmem>>, vector<32x256xf32>
    %c0_3 = arith.constant 0 : index
    %c0_4 = arith.constant 0 : index
    %2 = vector.load %arg3[%c0_3, %c0_4] : memref<32x256xf32, #tpu.memory_space<vmem>>, vector<32x256xf32>
    %cst = arith.constant 15.489727 : f32
    %3 = vector.broadcast %cst : f32 to vector<32x256xf32>
    %4 = arith.cmpf oge, %0, %3 : vector<32x256xf32>
    %cst_5 = arith.constant -77.402916 : f32
    %5 = vector.broadcast %cst_5 : f32 to vector<32x256xf32>
    %6 = arith.subf %0, %5 : vector<32x256xf32>
    %cst_6 = arith.constant 0.00117679394 : f32
    %7 = vector.broadcast %cst_6 : f32 to vector<32x256xf32>
    %8 = arith.mulf %7, %6 : vector<32x256xf32>
    %cst_7 = arith.constant -44.9005432 : f32
    %9 = vector.broadcast %cst_7 : f32 to vector<32x256xf32>
    %10 = arith.subf %0, %9 : vector<32x256xf32>
    %11 = arith.mulf %8, %10 : vector<32x256xf32>
    %12 = arith.addf %0, %11 : vector<32x256xf32>
    %13 = arith.subf %2, %1 : vector<32x256xf32>
    %cst_8 = arith.constant 0.00263157906 : f32
    %14 = vector.broadcast %cst_8 : f32 to vector<32x256xf32>
    %15 = arith.mulf %14, %13 : vector<32x256xf32>
    %16 = arith.addf %12, %15 : vector<32x256xf32>
    %cst_9 = arith.constant 0.999671995 : f32
    %17 = vector.broadcast %cst_9 : f32 to vector<32x256xf32>
    %18 = arith.mulf %17, %1 : vector<32x256xf32>
    %cst_10 = arith.constant -77.402916 : f32
    %19 = vector.broadcast %cst_10 : f32 to vector<32x256xf32>
    %20 = arith.subf %16, %19 : vector<32x256xf32>
    %cst_11 = arith.constant 0.00802877825 : f32
    %21 = vector.broadcast %cst_11 : f32 to vector<32x256xf32>
    %22 = arith.mulf %21, %20 : vector<32x256xf32>
    %23 = arith.addf %18, %22 : vector<32x256xf32>
    %cst_12 = arith.constant -66.4656372 : f32
    %24 = vector.broadcast %cst_12 : f32 to vector<32x256xf32>
    %25 = arith.select %4, %24, %16 : vector<32x256xi1>, vector<32x256xf32>
    %cst_13 = arith.constant 5.000000e+01 : f32
    %26 = vector.broadcast %cst_13 : f32 to vector<32x256xf32>
    %27 = arith.addf %1, %26 : vector<32x256xf32>
    %28 = arith.select %4, %27, %23 : vector<32x256xi1>, vector<32x256xf32>
    %29 = arith.extui %4 : vector<32x256xi1> to vector<32x256xi8>
    %c0_14 = arith.constant 0 : index
    %c0_15 = arith.constant 0 : index
    %30 = vector.load %arg4[%c0_14, %c0_15] : memref<32x256xi8, #tpu.memory_space<vmem>>, vector<32x256xi8>
    tpu.vector_store %arg4[%c0_14, %c0_15], %29 {strides = array<i32>} : memref<32x256xi8, #tpu.memory_space<vmem>>, vector<32x256xi8>,
    %c0_16 = arith.constant 0 : index
    %c0_17 = arith.constant 0 : index
    %31 = vector.load %arg5[%c0_16, %c0_17] : memref<32x256xf32, #tpu.memory_space<vmem>>, vector<32x256xf32>
    tpu.vector_store %arg5[%c0_16, %c0_17], %25 {strides = array<i32>} : memref<32x256xf32, #tpu.memory_space<vmem>>, vector<32x256xf32>,
    %c0_18 = arith.constant 0 : index
    %c0_19 = arith.constant 0 : index
    %32 = vector.load %arg6[%c0_18, %c0_19] : memref<32x256xf32, #tpu.memory_space<vmem>>, vector<32x256xf32>
    tpu.vector_store %arg6[%c0_18, %c0_19], %28 {strides = array<i32>} : memref<32x256xf32, #tpu.memory_space<vmem>>, vector<32x256xf32>,
    return
  }
  func.func @transform_0(%arg0: i32) -> (i32, i32) {
    %c0_i32 = arith.constant 0 : i32
    %c0_i32_0 = arith.constant 0 : i32
    return %arg0, %c0_i32 : i32, i32
  }
  func.func @transform_1(%arg0: i32) -> (i32, i32) {
    %c0_i32 = arith.constant 0 : i32
    %c0_i32_0 = arith.constant 0 : i32
    return %arg0, %c0_i32 : i32, i32
  }
  func.func @transform_2(%arg0: i32) -> (i32, i32) {
    %c0_i32 = arith.constant 0 : i32
    %c0_i32_0 = arith.constant 0 : i32
    return %arg0, %c0_i32 : i32, i32
  }
  func.func @transform_3(%arg0: i32) -> (i32, i32) {
    %c0_i32 = arith.constant 0 : i32
    %c0_i32_0 = arith.constant 0 : i32
    return %arg0, %c0_i32 : i32, i32
  }
  func.func @transform_4(%arg0: i32) -> (i32, i32) {
    %c0_i32 = arith.constant 0 : i32
    %c0_i32_0 = arith.constant 0 : i32
    return %arg0, %c0_i32 : i32, i32
  }
  func.func @transform_5(%arg0: i32) -> (i32, i32) {
    %c0_i32 = arith.constant 0 : i32
    %c0_i32_0 = arith.constant 0 : i32
    return %arg0, %c0_i32 : i32, i32
  }
}

</mosaic_0001>

<llo_original>
// kernel: tpu_custom_call.1
$region0: #{tpu_custom_call.1}
  #allocation0 [shape = 'u32[]', space=smem, size = 0x4, offset = 0x4, fixed_abs, tag = 'smem constant byte address 0x4 - core index']
  #allocation1 [shape = 'u32[144,128]{1,0:T(1,128)}', space=vmem, size = 0x12000, scoped, tag = 'internal scratch']
  %s0 = inlined_call_operand.hbm [shape: f32[32,256], index: 0, kind: input, shape index: {}, may-alias: {0,4}]
  %s1 = inlined_call_operand.hbm [shape: f32[32,256], index: 1, kind: input, shape index: {}, may-alias: {1,5}]
  %s2 = inlined_call_operand.vmem [shape: f32[32,256], index: 2, kind: input, shape index: {}]
  %s3 = inlined_call_operand.hbm [shape: s8[32,256], index: 3, kind: output, shape index: {0}]
  %s4 = inlined_call_operand.hbm [shape: f32[32,256], index: 4, kind: output, shape index: {1}, may-alias: {0,4}]
  %s5 = inlined_call_operand.hbm [shape: f32[32,256], index: 5, kind: output, shape index: {2}, may-alias: {1,5}]
  %6 = xla_tuple %s3, %s4, %s5
  %s7 = sld [smem:[#allocation0]]
  $region46: #{tpu_custom_call.1} parent=0
    _
  %s9 = ssub.s32 1, %s7
  %s10 = scalar_select 0, %s9, %s7
  $region1: #{tpu_custom_call.1} parent=0
    #allocation2 [shape = 'u8[32768]{0}', space=vmem, size = 0x8000, scoped, tag = 'input window, operand 0, single buffered']
    #allocation3 [shape = 's32[1]{0}', space=sflag, size = 0x4, scoped, tag = 'scoped memory for tpu_custom_call.1']
    #allocation4 [shape = 's32[1]{0}', space=sflag, size = 0x4, scoped, tag = 'scoped memory for tpu_custom_call.1']
    #allocation5 [shape = 'u8[32768]{0}', space=vmem, size = 0x8000, scoped, tag = 'input window, operand 1, single buffered']
    #allocation6 [shape = 's32[1]{0}', space=sflag, size = 0x4, scoped, tag = 'scoped memory for tpu_custom_call.1']
    #allocation7 [shape = 'u8[8192]{0}', space=vmem, size = 0x2000, scoped, tag = 'output window, operand 0, single buffered']
    #allocation8 [shape = 'u8[32768]{0}', space=vmem, size = 0x8000, scoped, tag = 'output window, operand 1, single buffered']
    #allocation9 [shape = 's32[1]{0}', space=sflag, size = 0x4, scoped, tag = 'scoped memory for tpu_custom_call.1']
    #allocation10 [shape = 'u8[32768]{0}', space=vmem, size = 0x8000, scoped, tag = 'output window, operand 2, single buffered']
    %11 = vsyncpa [#allocation3], 0
    %12 = vsyncpa [#allocation6], 0
    %13 = vsyncpa [#allocation4], 0
    %14 = vsyncpa [#allocation9], 0
    // Predicated region
    $region2: #{tpu_custom_call.1} parent=1 // pred_check
      _
    $region3: #{tpu_custom_call.1} parent=1 // pred_check_branch
      %16 = sbr.rel (0) target = $region5
    $region4: #{tpu_custom_call.1} parent=1 // pred_region
      %s18 = ssub.s32 1024, 1024
      %19 = vsyncadd [#allocation3], %s18
      %s20 = sshll.u32 [#allocation2], 4
      %s21 = int_to_ptr.vmem [resolvable:$true] %s20
      %26 = dma.hbm_to_vmem [thread:$0]  %s0, 1024, %s21, [#allocation3], 256, 256, 16
    $region5: #{tpu_custom_call.1} parent=1 // pred_fallthru
      _
    // Predicated region
    $region6: #{tpu_custom_call.1} parent=1 // pred_check
      _
    $region7: #{tpu_custom_call.1} parent=1 // pred_check_branch
      %28 = sbr.rel (0) target = $region9
    $region8: #{tpu_custom_call.1} parent=1 // pred_region
      %s30 = ssub.s32 1024, 1024
      %31 = vsyncadd [#allocation6], %s30
      %s32 = sshll.u32 [#allocation5], 4
      %s33 = int_to_ptr.vmem [resolvable:$true] %s32
      %38 = dma.hbm_to_vmem [thread:$0]  %s1, 1024, %s33, [#allocation6], 256, 256, 16
    $region9: #{tpu_custom_call.1} parent=1 // pred_fallthru
      _
    // Predicated region
    $region10: #{tpu_custom_call.1} parent=1 // pred_check
      _
    $region11: #{tpu_custom_call.1} parent=1 // pred_check_branch
      %40 = sbr.rel (0) target = $region13
    $region12: #{tpu_custom_call.1} parent=1 // pred_region
      _
    $region13: #{tpu_custom_call.1} parent=1 // pred_fallthru
      _
    // Predicated region
    $region14: #{tpu_custom_call.1} parent=1 // pred_check
      _
    $region15: #{tpu_custom_call.1} parent=1 // pred_check_branch
      %42 = sbr.rel (0) target = $region17
    $region16: #{tpu_custom_call.1} parent=1 // pred_region
      %43 = dma.done [#allocation3], 1024
    $region17: #{tpu_custom_call.1} parent=1 // pred_fallthru
      _
    // Predicated region
    $region18: #{tpu_custom_call.1} parent=1 // pred_check
      _
    $region19: #{tpu_custom_call.1} parent=1 // pred_check_branch
      %45 = sbr.rel (0) target = $region21
    $region20: #{tpu_custom_call.1} parent=1 // pred_region
      %46 = dma.done [#allocation6], 1024
    $region21: #{tpu_custom_call.1} parent=1 // pred_fallthru
      _
    %v49 = vld [vmem:[#allocation2] sm:$0xff]
    %v50 = vld [vmem:[#allocation2 + $0x8] sm:$0xff]
    %v51 = vld [vmem:[#allocation2 + $0x10] sm:$0xff]
    %v52 = vld [vmem:[#allocation2 + $0x18] sm:$0xff]
    %v53 = vld [vmem:[#allocation2 + $0x20] sm:$0xff]
    %v54 = vld [vmem:[#allocation2 + $0x28] sm:$0xff]
    %v55 = vld [vmem:[#allocation2 + $0x30] sm:$0xff]
    %v56 = vld [vmem:[#allocation2 + $0x38] sm:$0xff]
    %v57 = vld [vmem:[#allocation5] sm:$0xff]
    %v58 = vld [vmem:[#allocation5 + $0x8] sm:$0xff]
    %v59 = vld [vmem:[#allocation5 + $0x10] sm:$0xff]
    %v60 = vld [vmem:[#allocation5 + $0x18] sm:$0xff]
    %v61 = vld [vmem:[#allocation5 + $0x20] sm:$0xff]
    %v62 = vld [vmem:[#allocation5 + $0x28] sm:$0xff]
    %v63 = vld [vmem:[#allocation5 + $0x30] sm:$0xff]
    %v64 = vld [vmem:[#allocation5 + $0x38] sm:$0xff]
    %v65 = vld [vmem:[%s2] sm:$0xff]
    %v66 = vld [vmem:[%s2 + $0x8] sm:$0xff]
    %v67 = vld [vmem:[%s2 + $0x10] sm:$0xff]
    %v68 = vld [vmem:[%s2 + $0x18] sm:$0xff]
    %v69 = vld [vmem:[%s2 + $0x20] sm:$0xff]
    %v70 = vld [vmem:[%s2 + $0x28] sm:$0xff]
    %v71 = vld [vmem:[%s2 + $0x30] sm:$0xff]
    %v72 = vld [vmem:[%s2 + $0x38] sm:$0xff]
    %vm73 = vcmp.ge.f32.partialorder %v49, 15.489727
    %vm74 = vcmp.ge.f32.partialorder %v50, 15.489727
    %vm75 = vcmp.ge.f32.partialorder %v51, 15.489727
    %vm76 = vcmp.ge.f32.partialorder %v52, 15.489727
    %vm77 = vcmp.ge.f32.partialorder %v53, 15.489727
    %vm78 = vcmp.ge.f32.partialorder %v54, 15.489727
    %vm79 = vcmp.ge.f32.partialorder %v55, 15.489727
    %vm80 = vcmp.ge.f32.partialorder %v56, 15.489727
    %v81 = vsub.f32 %v49, -77.402916
    %v82 = vsub.f32 %v50, -77.402916
    %v83 = vsub.f32 %v51, -77.402916
    %v84 = vsub.f32 %v52, -77.402916
    %v85 = vsub.f32 %v53, -77.402916
    %v86 = vsub.f32 %v54, -77.402916
    %v87 = vsub.f32 %v55, -77.402916
    %v88 = vsub.f32 %v56, -77.402916
    %v89 = vmul.f32 %v81, 0.001176794
    %v90 = vmul.f32 %v82, 0.001176794
    %v91 = vmul.f32 %v83, 0.001176794
    %v92 = vmul.f32 %v84, 0.001176794
    %v93 = vmul.f32 %v85, 0.001176794
    %v94 = vmul.f32 %v86, 0.001176794
    %v95 = vmul.f32 %v87, 0.001176794
    %v96 = vmul.f32 %v88, 0.001176794
    %v97 = vsub.f32 %v49, -44.900543
    %v98 = vsub.f32 %v50, -44.900543
    %v99 = vsub.f32 %v51, -44.900543
    %v100 = vsub.f32 %v52, -44.900543
    %v101 = vsub.f32 %v53, -44.900543
    %v102 = vsub.f32 %v54, -44.900543
    %v103 = vsub.f32 %v55, -44.900543
    %v104 = vsub.f32 %v56, -44.900543
    %v105 = vmul.f32 %v89, %v97
    %v106 = vmul.f32 %v90, %v98
    %v107 = vmul.f32 %v91, %v99
    %v108 = vmul.f32 %v92, %v100
    %v109 = vmul.f32 %v93, %v101
    %v110 = vmul.f32 %v94, %v102
    %v111 = vmul.f32 %v95, %v103
    %v112 = vmul.f32 %v96, %v104
    %v113 = vadd.f32 %v49, %v105
    %v114 = vadd.f32 %v50, %v106
    %v115 = vadd.f32 %v51, %v107
    %v116 = vadd.f32 %v52, %v108
    %v117 = vadd.f32 %v53, %v109
    %v118 = vadd.f32 %v54, %v110
    %v119 = vadd.f32 %v55, %v111
    %v120 = vadd.f32 %v56, %v112
    %v121 = vsub.f32 %v65, %v57
    %v122 = vsub.f32 %v66, %v58
    %v123 = vsub.f32 %v67, %v59
    %v124 = vsub.f32 %v68, %v60
    %v125 = vsub.f32 %v69, %v61
    %v126 = vsub.f32 %v70, %v62
    %v127 = vsub.f32 %v71, %v63
    %v128 = vsub.f32 %v72, %v64
    %v129 = vmul.f32 %v121, 0.002631579
    %v130 = vmul.f32 %v122, 0.002631579
    %v131 = vmul.f32 %v123, 0.002631579
    %v132 = vmul.f32 %v124, 0.002631579
    %v133 = vmul.f32 %v125, 0.002631579
    %v134 = vmul.f32 %v126, 0.002631579
    %v135 = vmul.f32 %v127, 0.002631579
    %v136 = vmul.f32 %v128, 0.002631579
    %v137 = vadd.f32 %v113, %v129
    %v138 = vadd.f32 %v114, %v130
    %v139 = vadd.f32 %v115, %v131
    %v140 = vadd.f32 %v116, %v132
    %v141 = vadd.f32 %v117, %v133
    %v142 = vadd.f32 %v118, %v134
    %v143 = vadd.f32 %v119, %v135
    %v144 = vadd.f32 %v120, %v136
    %v145 = vmul.f32 %v57, 0.999672
    %v146 = vmul.f32 %v58, 0.999672
    %v147 = vmul.f32 %v59, 0.999672
    %v148 = vmul.f32 %v60, 0.999672
    %v149 = vmul.f32 %v61, 0.999672
    %v150 = vmul.f32 %v62, 0.999672
    %v151 = vmul.f32 %v63, 0.999672
    %v152 = vmul.f32 %v64, 0.999672
    %v153 = vsub.f32 %v137, -77.402916
    %v154 = vsub.f32 %v138, -77.402916
    %v155 = vsub.f32 %v139, -77.402916
    %v156 = vsub.f32 %v140, -77.402916
    %v157 = vsub.f32 %v141, -77.402916
    %v158 = vsub.f32 %v142, -77.402916
    %v159 = vsub.f32 %v143, -77.402916
    %v160 = vsub.f32 %v144, -77.402916
    %v161 = vmul.f32 %v153, 0.008028778
    %v162 = vmul.f32 %v154, 0.008028778
    %v163 = vmul.f32 %v155, 0.008028778
    %v164 = vmul.f32 %v156, 0.008028778
    %v165 = vmul.f32 %v157, 0.008028778
    %v166 = vmul.f32 %v158, 0.008028778
    %v167 = vmul.f32 %v159, 0.008028778
    %v168 = vmul.f32 %v160, 0.008028778
    %v169 = vadd.f32 %v145, %v161
    %v170 = vadd.f32 %v146, %v162
    %v171 = vadd.f32 %v147, %v163
    %v172 = vadd.f32 %v148, %v164
    %v173 = vadd.f32 %v149, %v165
    %v174 = vadd.f32 %v150, %v166
    %v175 = vadd.f32 %v151, %v167
    %v176 = vadd.f32 %v152, %v168
    %v177 = vsel %vm73, -66.46564, %v137
    %v178 = vsel %vm74, -66.46564, %v138
    %v179 = vsel %vm75, -66.46564, %v139
    %v180 = vsel %vm76, -66.46564, %v140
    %v181 = vsel %vm77, -66.46564, %v141
    %v182 = vsel %vm78, -66.46564, %v142
    %v183 = vsel %vm79, -66.46564, %v143
    %v184 = vsel %vm80, -66.46564, %v144
    %v185 = vadd.f32 %v57, 50.0
    %v186 = vadd.f32 %v58, 50.0
    %v187 = vadd.f32 %v59, 50.0
    %v188 = vadd.f32 %v60, 50.0
    %v189 = vadd.f32 %v61, 50.0
    %v190 = vadd.f32 %v62, 50.0
    %v191 = vadd.f32 %v63, 50.0
    %v192 = vadd.f32 %v64, 50.0
    %v193 = vsel %vm73, %v185, %v169
    %v194 = vsel %vm74, %v186, %v170
    %v195 = vsel %vm75, %v187, %v171
    %v196 = vsel %vm76, %v188, %v172
    %v197 = vsel %vm77, %v189, %v173
    %v198 = vsel %vm78, %v190, %v174
    %v199 = vsel %vm79, %v191, %v175
    %v200 = vsel %vm80, %v192, %v176
    %vm201 = vmpackc.low %vm75, %vm73
    %vm202 = vmpackc.low %vm79, %vm77
    %vm203 = vmpackc.even %vm202, %vm201
    %vm204 = vmpackc.low %vm76, %vm74
    %vm205 = vmpackc.low %vm80, %vm78
    %vm206 = vmpackc.even %vm205, %vm204
    %v207 = vsel %vm203, 16843009, 0
    %v208 = vsel %vm206, 16843009, 0
    %209 = vst [vmem:[#allocation7] sm:$0xff] %v207
    %210 = vst [vmem:[#allocation7 + $0x8] sm:$0xff] %v208
    %211 = vst [vmem:[#allocation8] sm:$0xff] %v177
    %212 = vst [vmem:[#allocation8 + $0x8] sm:$0xff] %v178
    %213 = vst [vmem:[#allocation8 + $0x10] sm:$0xff] %v179
    %214 = vst [vmem:[#allocation8 + $0x18] sm:$0xff] %v180
    %215 = vst [vmem:[#allocation8 + $0x20] sm:$0xff] %v181
    %216 = vst [vmem:[#allocation8 + $0x28] sm:$0xff] %v182
    %217 = vst [vmem:[#allocation8 + $0x30] sm:$0xff] %v183
    %218 = vst [vmem:[#allocation8 + $0x38] sm:$0xff] %v184
    %219 = vst [vmem:[#allocation10] sm:$0xff] %v193
    %220 = vst [vmem:[#allocation10 + $0x8] sm:$0xff] %v194
    %221 = vst [vmem:[#allocation10 + $0x10] sm:$0xff] %v195
    %222 = vst [vmem:[#allocation10 + $0x18] sm:$0xff] %v196
    %223 = vst [vmem:[#allocation10 + $0x20] sm:$0xff] %v197
    %224 = vst [vmem:[#allocation10 + $0x28] sm:$0xff] %v198
    %225 = vst [vmem:[#allocation10 + $0x30] sm:$0xff] %v199
    %226 = vst [vmem:[#allocation10 + $0x38] sm:$0xff] %v200
    // Predicated region
    $region22: #{tpu_custom_call.1} parent=1 // pred_check
      _
    $region23: #{tpu_custom_call.1} parent=1 // pred_check_branch
      %228 = sbr.rel (0) target = $region25
    $region24: #{tpu_custom_call.1} parent=1 // pred_region
      %s230 = ssub.s32 256, 256
      %231 = vsyncadd [#allocation4], %s230
      %s233 = sshll.u32 [#allocation7], 4
      %s234 = int_to_ptr.vmem [resolvable:$true] %s233
      %236 = dma.vmem_to_hbm [thread:$0]  %s234, 256, %s3, [#allocation4]
    $region25: #{tpu_custom_call.1} parent=1 // pred_fallthru
      _
    // Predicated region
    $region26: #{tpu_custom_call.1} parent=1 // pred_check
      _
    $region27: #{tpu_custom_call.1} parent=1 // pred_check_branch
      %238 = sbr.rel (0) target = $region29
    $region28: #{tpu_custom_call.1} parent=1 // pred_region
      %s240 = ssub.s32 1024, 1024
      %241 = vsyncadd [#allocation9], %s240
      %s242 = sshll.u32 [#allocation8], 4
      %s243 = int_to_ptr.vmem [resolvable:$true] %s242
      %248 = dma.vmem_to_hbm [thread:$0]  %s243, 1024, %s4, [#allocation9], 256, 256, 16
    $region29: #{tpu_custom_call.1} parent=1 // pred_fallthru
      _
    // Predicated region
    $region30: #{tpu_custom_call.1} parent=1 // pred_check
      _
    $region31: #{tpu_custom_call.1} parent=1 // pred_check_branch
      %250 = sbr.rel (0) target = $region33
    $region32: #{tpu_custom_call.1} parent=1 // pred_region
      %s252 = ssub.s32 1024, 1024
      %253 = vsyncadd [#allocation9], %s252
      %s254 = sshll.u32 [#allocation10], 4
      %s255 = int_to_ptr.vmem [resolvable:$true] %s254
      %260 = dma.vmem_to_hbm [thread:$0]  %s255, 1024, %s5, [#allocation9], 256, 256, 16
    $region33: #{tpu_custom_call.1} parent=1 // pred_fallthru
      _
    // Predicated region
    $region34: #{tpu_custom_call.1} parent=1 // pred_check
      _
    $region35: #{tpu_custom_call.1} parent=1 // pred_check_branch
      %262 = sbr.rel (0) target = $region37
    $region36: #{tpu_custom_call.1} parent=1 // pred_region
      %263 = dma.done [#allocation4], 256
    $region37: #{tpu_custom_call.1} parent=1 // pred_fallthru
      _
    // Predicated region
    $region38: #{tpu_custom_call.1} parent=1 // pred_check
      _
    $region39: #{tpu_custom_call.1} parent=1 // pred_check_branch
      %265 = sbr.rel (0) target = $region41
    $region40: #{tpu_custom_call.1} parent=1 // pred_region
      %266 = dma.done [#allocation9], 1024
    $region41: #{tpu_custom_call.1} parent=1 // pred_fallthru
      _
    // Predicated region
    $region42: #{tpu_custom_call.1} parent=1 // pred_check
      _
    $region43: #{tpu_custom_call.1} parent=1 // pred_check_branch
      %268 = sbr.rel (0) target = $region45
    $region44: #{tpu_custom_call.1} parent=1 // pred_region
      %269 = dma.done [#allocation9], 1024
    $region45: #{tpu_custom_call.1} parent=1 // pred_fallthru
      _
    %270 = vsyncpa [#allocation3], 1
    %271 = vsyncpa [#allocation6], 1
    %272 = vsyncpa [#allocation4], 1
    %273 = vsyncpa [#allocation9], 1

</llo_original>
